<compile_context>
chip_gen: v7x
topology: tpu7x:2x2x1
jax: 0.10.0
libtpu: 0.0.40
codegen_flags: <defaults>
</compile_context>

<pallas_src>
import math
import numpy as np

import jax
import jax.numpy as jnp
from jax.experimental import pallas as pl
from jax.experimental.pallas import tpu as pltpu


# ----------------------------- host-side helpers -----------------------------

def get_hankel(seq_len: int) -> jnp.ndarray:
    entries = jnp.arange(1, seq_len + 1, dtype=jnp.float32)
    i_plus_j = entries[:, None] + entries[None, :]
    return 2.0 / (i_plus_j ** 3 - i_plus_j)


def get_spectral_filters(seq_len: int, K: int, dtype=jnp.bfloat16) -> jnp.ndarray:
    Z = get_hankel(seq_len)
    sigma, phi = jnp.linalg.eigh(Z)          # ascending eigenvalues (same as torch)
    sigma_k = jnp.maximum(sigma[-K:], 1e-9)
    phi_k = phi[:, -K:] * sigma_k ** 0.25
    return phi_k.astype(dtype)


def make_sym_outer_selectors(k: int):
    """R, C of shape (k, cp): (V@R)*(V@C) == symmetric_outer(V). NumPy f32."""
    rows, cols = np.triu_indices(k)          # row-major, same order as torch.triu_indices
    cp = len(rows)
    R = np.zeros((k, cp), np.float32)
    C = np.zeros((k, cp), np.float32)
    for p, (i, j) in enumerate(zip(rows, cols)):
        R[i, p] = 1.0
        C[j, p] = 1.0 if i == j else math.sqrt(2.0)
    return R, C, cp


def _pick_tq(T: int) -> int:
    """Time-tile size: whole sequence when small, 128/256 blocks when large."""
    if T <= 256:
        return T
    for tq in (256, 128, 64, 32, 16, 8):
        if T % tq == 0:
            return tq
    return T


# --------------------------------- the kernel --------------------------------

def spectral_attention_kernel(
    x_ref,       # (1, Tq, d)     bf16  input tile (batch b, time tile qi)
    wpre_ref,    # (d, T)         bf16  pre_proj weight^T
    bpre_ref,    # (1, T)         bf16  pre_proj bias
    qfkf_ref,    # (T, 2k)        bf16  [Q filters | K filters]
    wf_ref,      # (2k, 3*cpp)    bf16  fused [wq | R | C] (padded to cpp lanes)
    bf_ref,      # (1, 3*cpp)     bf16  fused bias [bq | 0 | 0]
    ld_ref,      # (Tq, Tq)       bf16  lower-tri block with decay folded into cols
    wo_ref,      # (cpp, d)       bf16  o_proj weight^T (padded rows are zero)
    bo_ref,      # (1, d)         bf16  o_proj bias
    o_ref,       # (1, Tq, d)     bf16  output tile
    carry_ref,   # (1, cpp)       f32   running decayed prefix sum (scratch)
):
    f32, bf16 = jnp.float32, jnp.bfloat16
    qi = pl.program_id(1)

    @pl.when(qi == 0)
    def _():
        carry_ref[...] = jnp.zeros_like(carry_ref)

    cpp = wf_ref.shape[1] // 3
    Tq = ld_ref.shape[0]

    x = x_ref[0]                                                          # (Tq, d) bf16

    # pre_proj: (Tq, d) @ (d, T) + b  -> (Tq, T)  (bf16 operands, f32 accumulate)
    xp = (jnp.dot(x, wpre_ref[...], preferred_element_type=f32)
          + bpre_ref[...].astype(f32)).astype(bf16)

    # one matmul for both spectral filters: [Qk | V]  (Tq, 2k)
    qkv = jnp.dot(xp, qfkf_ref[...], preferred_element_type=f32).astype(bf16)

    # one matmul for q_proj + symmetric-outer selectors: (Tq, 3*cpp)
    fused = (jnp.dot(qkv, wf_ref[...], preferred_element_type=f32)
             + bf_ref[...].astype(f32))
    Q = fused[:, :cpp]                                                    # (Tq, cpp) f32
    Z = (fused[:, cpp:2 * cpp] * fused[:, 2 * cpp:]).astype(bf16)         # sym outer

    # blocked-prefix causal cumsum (decay already folded into ld columns)
    Hloc = jnp.dot(ld_ref[...], Z, preferred_element_type=f32)            # (Tq, cpp)
    H = Hloc + carry_ref[...]                                             # add prefix
    carry_ref[...] = H[Tq - 1:, :]                                        # new prefix

    # gate + output projection
    Y = (Q * H).astype(bf16)                                              # (Tq, cpp)
    out = (jnp.dot(Y, wo_ref[...], preferred_element_type=f32)
           + bo_ref[...].astype(f32))                                     # (Tq, d)
    o_ref[0] = out.astype(o_ref.dtype)


# --------------------------------- wrapper -----------------------------------

def spectral_attention(x, params):
    """x: (B, T, d) bf16.  params: raw (unpadded) module parameters."""
    B, T, d = x.shape
    k = params["Qf"].shape[1]
    cp = params["wq_t"].shape[1]
    cpp = ((cp + 127) // 128) * 128          # lane-dense padded cp
    bf16 = jnp.bfloat16

    # ---- fold / pad parameters (trace-time weight prep, done once under jit) ----
    R_np, C_np, _ = make_sym_outer_selectors(k)
    Rp = jnp.zeros((k, cpp), jnp.float32).at[:, :cp].set(jnp.asarray(R_np)).astype(bf16)
    Cp = jnp.zeros((k, cpp), jnp.float32).at[:, :cp].set(jnp.asarray(C_np)).astype(bf16)

    wq_p = jnp.zeros((k, cpp), bf16).at[:, :cp].set(params["wq_t"].astype(bf16))
    bq_p = jnp.zeros((1, cpp), bf16).at[:, :cp].set(params["bq"].astype(bf16))
    wo_p = jnp.zeros((cpp, d), bf16).at[:cp, :].set(params["wo_t"].astype(bf16))

    qfkf = jnp.concatenate(
        [params["Qf"].astype(bf16), params["Kf"].astype(bf16)], axis=1)   # (T, 2k)

    Wf = jnp.zeros((2 * k, 3 * cpp), bf16)
    Wf = Wf.at[:k, :cpp].set(wq_p)           # Qk rows -> q_proj block
    Wf = Wf.at[k:, cpp:2 * cpp].set(Rp)      # V rows  -> row-selector block
    Wf = Wf.at[k:, 2 * cpp:].set(Cp)         # V rows  -> col-selector block (sqrt2 baked)
    bf_fused = jnp.zeros((1, 3 * cpp), bf16).at[:, :cpp].set(bq_p)

    # lower-triangular ones with decay folded into columns: L[t,s] = (t>=s)*decay[s]
    decay = params["decay"].astype(jnp.float32).reshape(T)
    t = jnp.arange(T)
    Ldec = ((t[:, None] >= t[None, :]).astype(jnp.float32) * decay[None, :]).astype(bf16)

    Tq = _pick_tq(T)
    n_tq = T // Tq

    const2d = lambda shape: pl.BlockSpec(shape, lambda b, q: (0, 0))

    return pl.pallas_call(
        spectral_attention_kernel,
        out_shape=jax.ShapeDtypeStruct((B, T, d), bf16),
        grid=(B, n_tq),
        in_specs=[
            pl.BlockSpec((1, Tq, d), lambda b, q: (b, q, 0)),   # x tile
            const2d((d, T)),                                    # pre_proj weight^T
            const2d((1, T)),                                    # pre_proj bias
            const2d((T, 2 * k)),                                # [Qf | Kf]
            const2d((2 * k, 3 * cpp)),                          # fused [wq|R|C]
            const2d((1, 3 * cpp)),                              # fused bias
            pl.BlockSpec((Tq, Tq), lambda b, q: (q, q)),        # diag block of L*decay
            const2d((cpp, d)),                                  # o_proj weight^T (padded)
            const2d((1, d)),                                    # o_proj bias
        ],
        out_specs=pl.BlockSpec((1, Tq, d), lambda b, q: (b, q, 0)),
        scratch_shapes=[pltpu.VMEM((1, cpp), jnp.float32)],     # running prefix sum
        compiler_params=pltpu.CompilerParams(
            dimension_semantics=("parallel", "arbitrary"),
            vmem_limit_bytes=48 * 1024 * 1024,
        ),
    )(
        x.astype(bf16),
        params["wpre_t"].astype(bf16), params["bpre"].astype(bf16),
        qfkf, Wf, bf_fused, Ldec, wo_p, params["bo"].astype(bf16),
    )


# ------------------------------ pure-JAX reference ----------------------------

def spectral_attention_ref(x, params):
    f32 = jnp.float32
    B, T, d = x.shape
    k = params["Qf"].shape[1]
    R_np, C_np, _ = make_sym_outer_selectors(k)
    xp = x.astype(f32)
    x_proj = xp @ params["wpre_t"].astype(f32) + params["bpre"].astype(f32)
    Q = x_proj @ params["Qf"].astype(f32)
    Q = Q @ params["wq_t"].astype(f32) + params["bq"].astype(f32)
    V = x_proj @ params["Kf"].astype(f32)
    Z = (V @ jnp.asarray(R_np)) * (V @ jnp.asarray(C_np))
    Z = Z * params["decay"].astype(f32).reshape(1, T, 1)
    H = jnp.cumsum(Z, axis=1)
    Y = Q * H
    out = Y @ params["wo_t"].astype(f32) + params["bo"].astype(f32)
    return out.astype(jnp.bfloat16)


# ----------------------------------- main -------------------------------------

if __name__ == "__main__":
    # SMALL shapes consistent with the module (d_model != seq_len so pre_proj is a Linear).
    # TODO(synk): the d_model == seq_len (nn.Identity pre_proj) branch is not wired up.
    B, T, d_model, k = 2, 16, 32, 4
    dtype = jnp.bfloat16

    key = jax.random.PRNGKey(0)
    k_x, k_pre_w, k_pre_b, k_q_w, k_q_b, k_o_w, k_o_b = jax.random.split(key, 7)

    filt = get_spectral_filters(T, k, dtype=dtype)           # (T, k)
    _, _, cp = make_sym_outer_selectors(k)

    def lin_init(kw, kb, fan_in, fan_out):
        bound = 1.0 / math.sqrt(fan_in)
        w_t = jax.random.uniform(kw, (fan_in, fan_out), jnp.float32, -bound, bound).astype(dtype)
        b = jax.random.uniform(kb, (1, fan_out), jnp.float32, -bound, bound).astype(dtype)
        return w_t, b

    wpre_t, bpre = lin_init(k_pre_w, k_pre_b, d_model, T)    # pre_proj: Linear(d_model, T)
    wq_t, bq = lin_init(k_q_w, k_q_b, k, cp)                 # q_proj:   Linear(k, cp)
    wo_t, bo = lin_init(k_o_w, k_o_b, cp, d_model)           # o_proj:   Linear(cp, d_model)

    # decay is a learnable parameter (init = ones); use a non-trivial value so the
    # decay-folded-into-L path is actually exercised by the correctness check.
    decay = jnp.linspace(0.85, 1.15, T, dtype=jnp.float32).astype(dtype)

    params = dict(
        wpre_t=wpre_t, bpre=bpre,
        Qf=filt,            # LearnableSpectralFilters init == spectral filters
        Kf=filt,            # FixedSpectralFilters buffer
        wq_t=wq_t, bq=bq,
        decay=decay,
        wo_t=wo_t, bo=bo,
    )

    x = jax.random.normal(k_x, (B, T, d_model), jnp.float32).astype(dtype)

    out = jax.jit(spectral_attention)(x, params)
    out = jax.block_until_ready(out)

    ref = spectral_attention_ref(x, params)
    np.testing.assert_allclose(np.asarray(out, np.float32), np.asarray(ref, np.float32),
                               rtol=5e-2, atol=5e-2)

    assert out.shape == (B, T, d_model) and out.dtype == jnp.bfloat16
    print("KERNEL_OK")
</pallas_src>

<mosaic_0001>
module attributes {stable_mosaic.version = 11 : i64} {
  func.func @spectral_attention_kernel(%arg0: i32, %arg1: i32, %arg2: memref<1x16x32xbf16, #tpu.memory_space<vmem>>, %arg3: memref<32x16xbf16, #tpu.memory_space<vmem>>, %arg4: memref<1x16xbf16, #tpu.memory_space<vmem>>, %arg5: memref<16x8xbf16, #tpu.memory_space<vmem>>, %arg6: memref<8x384xbf16, #tpu.memory_space<vmem>>, %arg7: memref<1x384xbf16, #tpu.memory_space<vmem>>, %arg8: memref<16x16xbf16, #tpu.memory_space<vmem>>, %arg9: memref<128x32xbf16, #tpu.memory_space<vmem>>, %arg10: memref<1x32xbf16, #tpu.memory_space<vmem>>, %arg11: memref<1x16x32xbf16, #tpu.memory_space<vmem>>, %arg12: memref<1x128xf32, #tpu.memory_space<vmem>>) attributes {dimension_semantics = [#tpu.dimension_semantics<parallel>, #tpu.dimension_semantics<arbitrary>], iteration_bounds = array<i64: 2, 1>, scalar_prefetch = 0 : i64, scratch_operands = 1 : i64, tpu.core_type = #tpu.core_type<tc>, window_params = [{transform_indices = @transform_0, window_bounds = array<i64: 1, 16, 32>}, {pipeline_mode = #tpu.pipeline_mode<synchronous>, transform_indices = @transform_1, window_bounds = array<i64: 32, 16>}, {pipeline_mode = #tpu.pipeline_mode<synchronous>, transform_indices = @transform_2, window_bounds = array<i64: 1, 16>}, {pipeline_mode = #tpu.pipeline_mode<synchronous>, transform_indices = @transform_3, window_bounds = array<i64: 16, 8>}, {pipeline_mode = #tpu.pipeline_mode<synchronous>, transform_indices = @transform_4, window_bounds = array<i64: 8, 384>}, {pipeline_mode = #tpu.pipeline_mode<synchronous>, transform_indices = @transform_5, window_bounds = array<i64: 1, 384>}, {transform_indices = @transform_6, window_bounds = array<i64: 16, 16>}, {pipeline_mode = #tpu.pipeline_mode<synchronous>, transform_indices = @transform_7, window_bounds = array<i64: 128, 32>}, {pipeline_mode = #tpu.pipeline_mode<synchronous>, transform_indices = @transform_8, window_bounds = array<i64: 1, 32>}, {transform_indices = @transform_9, window_bounds = array<i64: 1, 16, 32>}]} {
    %c0_i32 = arith.constant 0 : i32
    %0 = arith.cmpi eq, %arg1, %c0_i32 : i32
    %1 = arith.extui %0 : i1 to i32
    %c0_i32_0 = arith.constant 0 : i32
    %2 = arith.cmpi ne, %1, %c0_i32_0 : i32
    scf.if %2 {
      %cst_30 = arith.constant 0.000000e+00 : f32
      %45 = vector.broadcast %cst_30 : f32 to vector<1x128xf32>
      %c0_31 = arith.constant 0 : index
      %c0_32 = arith.constant 0 : index
      %46 = vector.load %arg12[%c0_31, %c0_32] : memref<1x128xf32, #tpu.memory_space<vmem>>, vector<1x128xf32>
      tpu.vector_store %arg12[%c0_31, %c0_32], %45 {strides = array<i32>} : memref<1x128xf32, #tpu.memory_space<vmem>>, vector<1x128xf32>,
    } else {
    }
    %c0 = arith.constant 0 : index
    %c0_1 = arith.constant 0 : index
    %c0_2 = arith.constant 0 : index
    %3 = vector.load %arg2[%c0, %c0_1, %c0_2] : memref<1x16x32xbf16, #tpu.memory_space<vmem>>, vector<1x16x32xbf16>
    %4 = vector.shape_cast %3 : vector<1x16x32xbf16> to vector<16x32xbf16>
    %c0_3 = arith.constant 0 : index
    %c0_4 = arith.constant 0 : index
    %5 = vector.load %arg3[%c0_3, %c0_4] : memref<32x16xbf16, #tpu.memory_space<vmem>>, vector<32x16xbf16>
    %cst = arith.constant dense<0.000000e+00> : vector<16x16xf32>
    %6 = tpu.matmul %4, %5, %cst {dimension_numbers = #tpu.dot_dimension_numbers<[1], [0], [0], [1], [0, 0, 1, 1], [], []>} : vector<16x32xbf16>, vector<32x16xbf16>, vector<16x16xf32> -> vector<16x16xf32>
    %c0_5 = arith.constant 0 : index
    %c0_6 = arith.constant 0 : index
    %7 = vector.load %arg4[%c0_5, %c0_6] : memref<1x16xbf16, #tpu.memory_space<vmem>>, vector<1x16xbf16>
    %8 = arith.extf %7 : vector<1x16xbf16> to vector<1x16xf32>
    %9 = vector.broadcast %8 : vector<1x16xf32> to vector<16x16xf32>
    %10 = arith.addf %6, %9 : vector<16x16xf32>
    %11 = arith.truncf %10 : vector<16x16xf32> to vector<16x16xbf16>
    %c0_7 = arith.constant 0 : index
    %c0_8 = arith.constant 0 : index
    %12 = vector.load %arg5[%c0_7, %c0_8] : memref<16x8xbf16, #tpu.memory_space<vmem>>, vector<16x8xbf16>
    %cst_9 = arith.constant dense<0.000000e+00> : vector<16x8xf32>
    %13 = tpu.matmul %11, %12, %cst_9 {dimension_numbers = #tpu.dot_dimension_numbers<[1], [0], [0], [1], [0, 0, 1, 1], [], []>} : vector<16x16xbf16>, vector<16x8xbf16>, vector<16x8xf32> -> vector<16x8xf32>
    %14 = arith.truncf %13 : vector<16x8xf32> to vector<16x8xbf16>
    %c0_10 = arith.constant 0 : index
    %c0_11 = arith.constant 0 : index
    %15 = vector.load %arg6[%c0_10, %c0_11] : memref<8x384xbf16, #tpu.memory_space<vmem>>, vector<8x384xbf16>
    %cst_12 = arith.constant dense<0.000000e+00> : vector<16x384xf32>
    %16 = tpu.matmul %14, %15, %cst_12 {dimension_numbers = #tpu.dot_dimension_numbers<[1], [0], [0], [1], [0, 0, 1, 1], [], []>} : vector<16x8xbf16>, vector<8x384xbf16>, vector<16x384xf32> -> vector<16x384xf32>
    %c0_13 = arith.constant 0 : index
    %c0_14 = arith.constant 0 : index
    %17 = vector.load %arg7[%c0_13, %c0_14] : memref<1x384xbf16, #tpu.memory_space<vmem>>, vector<1x384xbf16>
    %18 = arith.extf %17 : vector<1x384xbf16> to vector<1x384xf32>
    %19 = vector.broadcast %18 : vector<1x384xf32> to vector<16x384xf32>
    %20 = arith.addf %16, %19 : vector<16x384xf32>
    %21 = vector.extract_strided_slice %20 {offsets = [0, 0], sizes = [16, 128], strides = [1, 1]} : vector<16x384xf32> to vector<16x128xf32>
    %22 = vector.extract_strided_slice %20 {offsets = [0, 128], sizes = [16, 128], strides = [1, 1]} : vector<16x384xf32> to vector<16x128xf32>
    %23 = vector.extract_strided_slice %20 {offsets = [0, 256], sizes = [16, 128], strides = [1, 1]} : vector<16x384xf32> to vector<16x128xf32>
    %24 = arith.mulf %22, %23 : vector<16x128xf32>
    %25 = arith.truncf %24 : vector<16x128xf32> to vector<16x128xbf16>
    %c0_15 = arith.constant 0 : index
    %c0_16 = arith.constant 0 : index
    %26 = vector.load %arg8[%c0_15, %c0_16] : memref<16x16xbf16, #tpu.memory_space<vmem>>, vector<16x16xbf16>
    %cst_17 = arith.constant dense<0.000000e+00> : vector<16x128xf32>
    %27 = tpu.matmul %26, %25, %cst_17 {dimension_numbers = #tpu.dot_dimension_numbers<[1], [0], [0], [1], [0, 0, 1, 1], [], []>} : vector<16x16xbf16>, vector<16x128xbf16>, vector<16x128xf32> -> vector<16x128xf32>
    %c0_18 = arith.constant 0 : index
    %c0_19 = arith.constant 0 : index
    %28 = vector.load %arg12[%c0_18, %c0_19] : memref<1x128xf32, #tpu.memory_space<vmem>>, vector<1x128xf32>
    %29 = vector.broadcast %28 : vector<1x128xf32> to vector<16x128xf32>
    %30 = arith.addf %27, %29 : vector<16x128xf32>
    %31 = vector.extract_strided_slice %30 {offsets = [15, 0], sizes = [1, 128], strides = [1, 1]} : vector<16x128xf32> to vector<1x128xf32>
    %c0_20 = arith.constant 0 : index
    %c0_21 = arith.constant 0 : index
    %32 = vector.load %arg12[%c0_20, %c0_21] : memref<1x128xf32, #tpu.memory_space<vmem>>, vector<1x128xf32>
    tpu.vector_store %arg12[%c0_20, %c0_21], %31 {strides = array<i32>} : memref<1x128xf32, #tpu.memory_space<vmem>>, vector<1x128xf32>,
    %33 = arith.mulf %21, %30 : vector<16x128xf32>
    %34 = arith.truncf %33 : vector<16x128xf32> to vector<16x128xbf16>
    %c0_22 = arith.constant 0 : index
    %c0_23 = arith.constant 0 : index
    %35 = vector.load %arg9[%c0_22, %c0_23] : memref<128x32xbf16, #tpu.memory_space<vmem>>, vector<128x32xbf16>
    %cst_24 = arith.constant dense<0.000000e+00> : vector<16x32xf32>
    %36 = tpu.matmul %34, %35, %cst_24 {dimension_numbers = #tpu.dot_dimension_numbers<[1], [0], [0], [1], [0, 0, 1, 1], [], []>} : vector<16x128xbf16>, vector<128x32xbf16>, vector<16x32xf32> -> vector<16x32xf32>
    %c0_25 = arith.constant 0 : index
    %c0_26 = arith.constant 0 : index
    %37 = vector.load %arg10[%c0_25, %c0_26] : memref<1x32xbf16, #tpu.memory_space<vmem>>, vector<1x32xbf16>
    %38 = arith.extf %37 : vector<1x32xbf16> to vector<1x32xf32>
    %39 = vector.broadcast %38 : vector<1x32xf32> to vector<16x32xf32>
    %40 = arith.addf %36, %39 : vector<16x32xf32>
    %41 = arith.truncf %40 : vector<16x32xf32> to vector<16x32xbf16>
    %c0_27 = arith.constant 0 : index
    %c0_28 = arith.constant 0 : index
    %c0_29 = arith.constant 0 : index
    %42 = vector.load %arg11[%c0_27, %c0_28, %c0_29] : memref<1x16x32xbf16, #tpu.memory_space<vmem>>, vector<1x16x32xbf16>
    %43 = vector.shape_cast %42 : vector<1x16x32xbf16> to vector<16x32xbf16>
    %44 = vector.shape_cast %41 : vector<16x32xbf16> to vector<1x16x32xbf16>
    tpu.vector_store %arg11[%c0_27, %c0_28, %c0_29], %44 {strides = array<i32>} : memref<1x16x32xbf16, #tpu.memory_space<vmem>>, vector<1x16x32xbf16>,
    return
  }
  func.func @transform_0(%arg0: i32, %arg1: i32) -> (i32, i32, i32) {
    %c0_i32 = arith.constant 0 : i32
    %c0_i32_0 = arith.constant 0 : i32
    return %arg0, %arg1, %c0_i32 : i32, i32, i32
  }
  func.func @transform_1(%arg0: i32, %arg1: i32) -> (i32, i32) {
    %c0_i32 = arith.constant 0 : i32
    %c0_i32_0 = arith.constant 0 : i32
    %c0_i32_1 = arith.constant 0 : i32
    return %c0_i32, %c0_i32_0 : i32, i32
  }
  func.func @transform_2(%arg0: i32, %arg1: i32) -> (i32, i32) {
    %c0_i32 = arith.constant 0 : i32
    %c0_i32_0 = arith.constant 0 : i32
    %c0_i32_1 = arith.constant 0 : i32
    return %c0_i32, %c0_i32_0 : i32, i32
  }
  func.func @transform_3(%arg0: i32, %arg1: i32) -> (i32, i32) {
    %c0_i32 = arith.constant 0 : i32
    %c0_i32_0 = arith.constant 0 : i32
    %c0_i32_1 = arith.constant 0 : i32
    return %c0_i32, %c0_i32_0 : i32, i32
  }
  func.func @transform_4(%arg0: i32, %arg1: i32) -> (i32, i32) {
    %c0_i32 = arith.constant 0 : i32
    %c0_i32_0 = arith.constant 0 : i32
    %c0_i32_1 = arith.constant 0 : i32
    return %c0_i32, %c0_i32_0 : i32, i32
  }
  func.func @transform_5(%arg0: i32, %arg1: i32) -> (i32, i32) {
    %c0_i32 = arith.constant 0 : i32
    %c0_i32_0 = arith.constant 0 : i32
    %c0_i32_1 = arith.constant 0 : i32
    return %c0_i32, %c0_i32_0 : i32, i32
  }
  func.func @transform_6(%arg0: i32, %arg1: i32) -> (i32, i32) {
    %c0_i32 = arith.constant 0 : i32
    return %arg1, %arg1 : i32, i32
  }
  func.func @transform_7(%arg0: i32, %arg1: i32) -> (i32, i32) {
    %c0_i32 = arith.constant 0 : i32
    %c0_i32_0 = arith.constant 0 : i32
    %c0_i32_1 = arith.constant 0 : i32
    return %c0_i32, %c0_i32_0 : i32, i32
  }
  func.func @transform_8(%arg0: i32, %arg1: i32) -> (i32, i32) {
    %c0_i32 = arith.constant 0 : i32
    %c0_i32_0 = arith.constant 0 : i32
    %c0_i32_1 = arith.constant 0 : i32
    return %c0_i32, %c0_i32_0 : i32, i32
  }
  func.func @transform_9(%arg0: i32, %arg1: i32) -> (i32, i32, i32) {
    %c0_i32 = arith.constant 0 : i32
    %c0_i32_0 = arith.constant 0 : i32
    return %arg0, %arg1, %c0_i32 : i32, i32, i32
  }
}

</mosaic_0001>

<llo_original>
// kernel: spectral_attention.1
$region0: #{spectral_attention.1}
  #allocation0 [shape = 'u32[]', space=smem, size = 0x4, offset = 0x4, fixed_abs, tag = 'smem constant byte address 0x4 - core index']
  #allocation1 [shape = 'u32[144,128]{1,0:T(1,128)}', space=vmem, size = 0x12000, scoped, tag = 'internal scratch']
  #allocation2 [shape = 'f32[1,128]{1,0:T(1,128)}', space=vmem, size = 0x200, scoped, tag = 'scratch operand']
  %s0 = inlined_call_operand.vmem [shape: bf16[2,16,32], index: 0, kind: input, shape index: {}]
  %s1 = inlined_call_operand.vmem [shape: bf16[32,16], index: 1, kind: input, shape index: {}]
  %s2 = inlined_call_operand.vmem [shape: bf16[1,16], index: 2, kind: input, shape index: {}]
  %s3 = inlined_call_operand.vmem [shape: bf16[16,8], index: 3, kind: input, shape index: {}]
  %s4 = inlined_call_operand.vmem [shape: bf16[8,384], index: 4, kind: input, shape index: {}]
  %s5 = inlined_call_operand.vmem [shape: bf16[1,384], index: 5, kind: input, shape index: {}]
  %s6 = inlined_call_operand.vmem [shape: bf16[16,16], index: 6, kind: input, shape index: {}]
  %s7 = inlined_call_operand.vmem [shape: bf16[128,32], index: 7, kind: input, shape index: {}]
  %s8 = inlined_call_operand.vmem [shape: bf16[1,32], index: 8, kind: input, shape index: {}]
  %s9 = inlined_call_operand.hbm [shape: bf16[2,16,32], index: 9, kind: output, shape index: {}]
  %s10 = sld [smem:[#allocation0]]
  $region73: #{spectral_attention.1} parent=0
    _
  %s12 = ssub.s32 1, %s10
  %s13 = scalar_select 0, %s12, %s10
  $region1: #{spectral_attention.1} parent=0
    #allocation3 [shape = 'u8[8192]{0}', space=vmem, size = 0x2000, scoped, tag = 'output window, operand 0']
    #allocation4 [shape = 's32[2]{0}', space=sflag, size = 0x8, scoped, tag = 'scoped memory for spectral_attention.1']
    %14 = vsyncpa [#allocation4], 0
    %s15 = scalar_lea.sflag [#allocation4], 1
    %16 = vsyncpa %s15, 0
    loop: start=0, step=1, limit=4
    $region2: #{spectral_attention.1} parent=1 // loop_pre_header
      _
    $region3: #{spectral_attention.1} parent=1 // loop_header
      %s18 = sphi 0, %s22
      %p19 = scmp.ge.s32.totalorder %s18, 4
      %s25 = sphi 0, %s37
      %s26 = sphi 0, %s33
      %s27 = sphi 0, %s25
      %s28 = sphi 0, %s26
      %s29 = sphi 0, %s27
      %s30 = sphi 0, %s28
      %s42 = sphi 0, %s44
      %s45 = sphi 0, %s42
      %s46 = sphi 0, %s45
      %s62 = sphi 0, %s46
      %s66 = sphi 0, %s66
      %s68 = sphi 0, %s66
      %s69 = sphi 0, %s68
      %s83 = sphi 0, %s69
      %s87 = sphi 0, %s87
      %s89 = sphi 0, %s87
      %s90 = sphi 0, %s89
      %s104 = sphi 0, %s90
      %s108 = sphi 0, %s108
      %s110 = sphi 0, %s108
      %s111 = sphi 0, %s110
      %s125 = sphi 0, %s111
      %s129 = sphi 0, %s129
      %s131 = sphi 0, %s129
      %s132 = sphi 0, %s131
      %s146 = sphi 0, %s132
      %s150 = sphi 0, %s150
      %s152 = sphi 0, %s150
      %s153 = sphi 0, %s152
      %s167 = sphi 0, %s153
      %s175 = sphi 0, %s177
      %s178 = sphi 0, %s175
      %s179 = sphi 0, %s178
      %s195 = sphi 0, %s179
      %s199 = sphi 0, %s199
      %s201 = sphi 0, %s199
      %s202 = sphi 0, %s201
      %s216 = sphi 0, %s202
      %s220 = sphi 0, %s220
      %s222 = sphi 0, %s220
      %s223 = sphi 0, %s222
      %s237 = sphi 0, %s223
      %s245 = sphi 0, %s247
      %s248 = sphi 0, %s245
      %s249 = sphi 0, %s248
      %s265 = sphi 0, %s249
    $region4: #{spectral_attention.1} parent=1 // loop_header_branch
      %21 = sbr.rel (%p19) target = $region8
    $region5: #{spectral_attention.1} parent=1 // loop_body
      %s23 = ssub.s32 %s18, 1
      %s24 = ssub.s32 %s18, 2
      %s31 = sadd.s32 1, %s26
      %p32 = scmp.ge.s32.totalorder %s31, 1
      %s33 = scalar_select %p32, 0, %s31
      %s34 = sadd.s32 1, %s25
      %s35 = scalar_select %p32, %s34, %s25
      %p36 = scmp.ge.s32.totalorder %s35, 2
      %s37 = scalar_select %p36, 0, %s35
      %s38 = ssub.s32 %s25, %s37
      %s39 = ssub.s32 %s26, %s33
      %s40 = sor.u32 %s38, %s39
      %p41 = scmp.eq.s32.totalorder %s40, 0
      %s43 = sadd.s32 %s42, 1
      %s44 = scalar_select %p41, %s42, %s43
      %p47 = pneg %p41
      %p48 = scmp.eq.s32.totalorder %s18, 1
      %p49 = por %p47, %p48
      %p50 = scmp.ne.s32.totalorder %s42, %s45
      %p51 = scmp.eq.s32.totalorder %s18, 0
      %p52 = por %p50, %p51
      %p53 = scmp.ne.s32.totalorder %s42, %s45
      %p54 = scmp.eq.s32.totalorder %s23, 1
      %p55 = por %p53, %p54
      %p56 = scmp.ne.s32.totalorder %s45, %s46
      %p57 = scmp.eq.s32.totalorder %s23, 0
      %p58 = por %p56, %p57
      %p59 = scmp.ne.s32.totalorder %s45, %s46
      %p60 = scmp.eq.s32.totalorder %s24, 1
      %p61 = por %p59, %p60
      %p63 = scmp.ne.s32.totalorder %s46, %s62
      %p64 = scmp.eq.s32.totalorder %s24, 0
      %p65 = por %p63, %p64
      %s67 = sadd.s32 %s66, 1
      %p70 = scmp.eq.s32.totalorder %s18, 1
      %p71 = scmp.ne.s32.totalorder %s66, %s68
      %p72 = scmp.eq.s32.totalorder %s18, 0
      %p73 = por %p71, %p72
      %p74 = scmp.ne.s32.totalorder %s66, %s68
      %p75 = scmp.eq.s32.totalorder %s23, 1
      %p76 = por %p74, %p75
      %p77 = scmp.ne.s32.totalorder %s68, %s69
      %p78 = scmp.eq.s32.totalorder %s23, 0
      %p79 = por %p77, %p78
      %p80 = scmp.ne.s32.totalorder %s68, %s69
      %p81 = scmp.eq.s32.totalorder %s24, 1
      %p82 = por %p80, %p81
      %p84 = scmp.ne.s32.totalorder %s69, %s83
      %p85 = scmp.eq.s32.totalorder %s24, 0
      %p86 = por %p84, %p85
      %s88 = sadd.s32 %s87, 1
      %p91 = scmp.eq.s32.totalorder %s18, 1
      %p92 = scmp.ne.s32.totalorder %s87, %s89
      %p93 = scmp.eq.s32.totalorder %s18, 0
      %p94 = por %p92, %p93
      %p95 = scmp.ne.s32.totalorder %s87, %s89
      %p96 = scmp.eq.s32.totalorder %s23, 1
      %p97 = por %p95, %p96
      %p98 = scmp.ne.s32.totalorder %s89, %s90
      %p99 = scmp.eq.s32.totalorder %s23, 0
      %p100 = por %p98, %p99
      %p101 = scmp.ne.s32.totalorder %s89, %s90
      %p102 = scmp.eq.s32.totalorder %s24, 1
      %p103 = por %p101, %p102
      %p105 = scmp.ne.s32.totalorder %s90, %s104
      %p106 = scmp.eq.s32.totalorder %s24, 0
      %p107 = por %p105, %p106
      %s109 = sadd.s32 %s108, 1
      %p112 = scmp.eq.s32.totalorder %s18, 1
      %p113 = scmp.ne.s32.totalorder %s108, %s110
      %p114 = scmp.eq.s32.totalorder %s18, 0
      %p115 = por %p113, %p114
      %p116 = scmp.ne.s32.totalorder %s108, %s110
      %p117 = scmp.eq.s32.totalorder %s23, 1
      %p118 = por %p116, %p117
      %p119 = scmp.ne.s32.totalorder %s110, %s111
      %p120 = scmp.eq.s32.totalorder %s23, 0
      %p121 = por %p119, %p120
      %p122 = scmp.ne.s32.totalorder %s110, %s111
      %p123 = scmp.eq.s32.totalorder %s24, 1
      %p124 = por %p122, %p123
      %p126 = scmp.ne.s32.totalorder %s111, %s125
      %p127 = scmp.eq.s32.totalorder %s24, 0
      %p128 = por %p126, %p127
      %s130 = sadd.s32 %s129, 1
      %p133 = scmp.eq.s32.totalorder %s18, 1
      %p134 = scmp.ne.s32.totalorder %s129, %s131
      %p135 = scmp.eq.s32.totalorder %s18, 0
      %p136 = por %p134, %p135
      %p137 = scmp.ne.s32.totalorder %s129, %s131
      %p138 = scmp.eq.s32.totalorder %s23, 1
      %p139 = por %p137, %p138
      %p140 = scmp.ne.s32.totalorder %s131, %s132
      %p141 = scmp.eq.s32.totalorder %s23, 0
      %p142 = por %p140, %p141
      %p143 = scmp.ne.s32.totalorder %s131, %s132
      %p144 = scmp.eq.s32.totalorder %s24, 1
      %p145 = por %p143, %p144
      %p147 = scmp.ne.s32.totalorder %s132, %s146
      %p148 = scmp.eq.s32.totalorder %s24, 0
      %p149 = por %p147, %p148
      %s151 = sadd.s32 %s150, 1
      %p154 = scmp.eq.s32.totalorder %s18, 1
      %p155 = scmp.ne.s32.totalorder %s150, %s152
      %p156 = scmp.eq.s32.totalorder %s18, 0
      %p157 = por %p155, %p156
      %p158 = scmp.ne.s32.totalorder %s150, %s152
      %p159 = scmp.eq.s32.totalorder %s23, 1
      %p160 = por %p158, %p159
      %p161 = scmp.ne.s32.totalorder %s152, %s153
      %p162 = scmp.eq.s32.totalorder %s23, 0
      %p163 = por %p161, %p162
      %p164 = scmp.ne.s32.totalorder %s152, %s153
      %p165 = scmp.eq.s32.totalorder %s24, 1
      %p166 = por %p164, %p165
      %p168 = scmp.ne.s32.totalorder %s153, %s167
      %p169 = scmp.eq.s32.totalorder %s24, 0
      %p170 = por %p168, %p169
      %s171 = ssub.s32 %s26, %s33
      %s172 = ssub.s32 %s26, %s33
      %s173 = sor.u32 %s171, %s172
      %p174 = scmp.eq.s32.totalorder %s173, 0
      %s176 = sadd.s32 %s175, 1
      %s177 = scalar_select %p174, %s175, %s176
      %p180 = pneg %p174
      %p181 = scmp.eq.s32.totalorder %s18, 1
      %p182 = por %p180, %p181
      %p183 = scmp.ne.s32.totalorder %s175, %s178
      %p184 = scmp.eq.s32.totalorder %s18, 0
      %p185 = por %p183, %p184
      %p186 = scmp.ne.s32.totalorder %s175, %s178
      %p187 = scmp.eq.s32.totalorder %s23, 1
      %p188 = por %p186, %p187
      %p189 = scmp.ne.s32.totalorder %s178, %s179
      %p190 = scmp.eq.s32.totalorder %s23, 0
      %p191 = por %p189, %p190
      %p192 = scmp.ne.s32.totalorder %s178, %s179
      %p193 = scmp.eq.s32.totalorder %s24, 1
      %p194 = por %p192, %p193
      %p196 = scmp.ne.s32.totalorder %s179, %s195
      %p197 = scmp.eq.s32.totalorder %s24, 0
      %p198 = por %p196, %p197
      %s200 = sadd.s32 %s199, 1
      %p203 = scmp.eq.s32.totalorder %s18, 1
      %p204 = scmp.ne.s32.totalorder %s199, %s201
      %p205 = scmp.eq.s32.totalorder %s18, 0
      %p206 = por %p204, %p205
      %p207 = scmp.ne.s32.totalorder %s199, %s201
      %p208 = scmp.eq.s32.totalorder %s23, 1
      %p209 = por %p207, %p208
      %p210 = scmp.ne.s32.totalorder %s201, %s202
      %p211 = scmp.eq.s32.totalorder %s23, 0
      %p212 = por %p210, %p211
      %p213 = scmp.ne.s32.totalorder %s201, %s202
      %p214 = scmp.eq.s32.totalorder %s24, 1
      %p215 = por %p213, %p214
      %p217 = scmp.ne.s32.totalorder %s202, %s216
      %p218 = scmp.eq.s32.totalorder %s24, 0
      %p219 = por %p217, %p218
      %s221 = sadd.s32 %s220, 1
      %p224 = scmp.eq.s32.totalorder %s18, 1
      %p225 = scmp.ne.s32.totalorder %s220, %s222
      %p226 = scmp.eq.s32.totalorder %s18, 0
      %p227 = por %p225, %p226
      %p228 = scmp.ne.s32.totalorder %s220, %s222
      %p229 = scmp.eq.s32.totalorder %s23, 1
      %p230 = por %p228, %p229
      %p231 = scmp.ne.s32.totalorder %s222, %s223
      %p232 = scmp.eq.s32.totalorder %s23, 0
      %p233 = por %p231, %p232
      %p234 = scmp.ne.s32.totalorder %s222, %s223
      %p235 = scmp.eq.s32.totalorder %s24, 1
      %p236 = por %p234, %p235
      %p238 = scmp.ne.s32.totalorder %s223, %s237
      %p239 = scmp.eq.s32.totalorder %s24, 0
      %p240 = por %p238, %p239
      %s241 = ssub.s32 %s25, %s37
      %s242 = ssub.s32 %s26, %s33
      %s243 = sor.u32 %s241, %s242
      %p244 = scmp.eq.s32.totalorder %s243, 0
      %s246 = sadd.s32 %s245, 1
      %s247 = scalar_select %p244, %s245, %s246
      %p250 = pneg %p244
      %p251 = scmp.eq.s32.totalorder %s18, 1
      %p252 = por %p250, %p251
      %p253 = scmp.ne.s32.totalorder %s245, %s248
      %p254 = scmp.eq.s32.totalorder %s18, 0
      %p255 = por %p253, %p254
      %p256 = scmp.ne.s32.totalorder %s245, %s248
      %p257 = scmp.eq.s32.totalorder %s23, 1
      %p258 = por %p256, %p257
      %p259 = scmp.ne.s32.totalorder %s248, %s249
      %p260 = scmp.eq.s32.totalorder %s23, 0
      %p261 = por %p259, %p260
      %p262 = scmp.ne.s32.totalorder %s248, %s249
      %p263 = scmp.eq.s32.totalorder %s24, 1
      %p264 = por %p262, %p263
      %p266 = scmp.ne.s32.totalorder %s249, %s265
      %p267 = scmp.eq.s32.totalorder %s24, 0
      %p268 = por %p266, %p267
      %p269 = scmp.le.s32.totalorder 1, %s18
      %p270 = scmp.lt.s32.totalorder %s18, 3
      %p271 = pnand %p269, %p270
      %p272 = pneg %p271
      // Predicated region
      $region9: #{spectral_attention.1} parent=5 // pred_check
        _
      $region10: #{spectral_attention.1} parent=5 // pred_check_branch
        %274 = sbr.rel (%p271) target = $region12
      $region11: #{spectral_attention.1} parent=5 // pred_region
        %s275 = ssub.s32 %s18, 1
        // Predicated region
        $region13: #{spectral_attention.1} parent=11 // pred_check
          %p276 = pneg %p79
        $region14: #{spectral_attention.1} parent=11 // pred_check_branch
          %278 = sbr.rel (%p276) target = $region16
        $region15: #{spectral_attention.1} parent=11 // pred_region
          _
        $region16: #{spectral_attention.1} parent=11 // pred_fallthru
          _
        // Predicated region
        $region17: #{spectral_attention.1} parent=11 // pred_check
          %p279 = pneg %p100
        $region18: #{spectral_attention.1} parent=11 // pred_check_branch
          %281 = sbr.rel (%p279) target = $region20
        $region19: #{spectral_attention.1} parent=11 // pred_region
          _
        $region20: #{spectral_attention.1} parent=11 // pred_fallthru
          _
        // Predicated region
        $region21: #{spectral_attention.1} parent=11 // pred_check
          %p282 = pneg %p121
        $region22: #{spectral_attention.1} parent=11 // pred_check_branch
          %284 = sbr.rel (%p282) target = $region24
        $region23: #{spectral_attention.1} parent=11 // pred_region
          _
        $region24: #{spectral_attention.1} parent=11 // pred_fallthru
          _
        // Predicated region
        $region25: #{spectral_attention.1} parent=11 // pred_check
          %p285 = pneg %p142
        $region26: #{spectral_attention.1} parent=11 // pred_check_branch
          %287 = sbr.rel (%p285) target = $region28
        $region27: #{spectral_attention.1} parent=11 // pred_region
          _
        $region28: #{spectral_attention.1} parent=11 // pred_fallthru
          _
        // Predicated region
        $region29: #{spectral_attention.1} parent=11 // pred_check
          %p288 = pneg %p163
        $region30: #{spectral_attention.1} parent=11 // pred_check_branch
          %290 = sbr.rel (%p288) target = $region32
        $region31: #{spectral_attention.1} parent=11 // pred_region
          _
        $region32: #{spectral_attention.1} parent=11 // pred_fallthru
          _
        // Predicated region
        $region33: #{spectral_attention.1} parent=11 // pred_check
          %p291 = pneg %p191
        $region34: #{spectral_attention.1} parent=11 // pred_check_branch
          %293 = sbr.rel (%p291) target = $region36
        $region35: #{spectral_attention.1} parent=11 // pred_region
          %s294 = smul.u32 2, %s28
          %p295 = scmp.lt.s32.totalorder %s294, 1
          %s296 = scalar_select %p295, %s294, 1
          %p297 = scmp.lt.s32.totalorder %s28, 0
          %s298 = scalar_select %p297, %s28, 0
          %s299 = sadd.s32 %s298, %s296
          %s300 = smul.addr %s299, 4
          %s301 = scalar_lea.vmem %s6, %s300
          %s302 = smul.u32 2, %s28
        $region36: #{spectral_attention.1} parent=11 // pred_fallthru
          _
        // Predicated region
        $region37: #{spectral_attention.1} parent=11 // pred_check
          %p303 = pneg %p212
        $region38: #{spectral_attention.1} parent=11 // pred_check_branch
          %305 = sbr.rel (%p303) target = $region40
        $region39: #{spectral_attention.1} parent=11 // pred_region
          _
        $region40: #{spectral_attention.1} parent=11 // pred_fallthru
          _
        // Predicated region
        $region41: #{spectral_attention.1} parent=11 // pred_check
          %p306 = pneg %p233
        $region42: #{spectral_attention.1} parent=11 // pred_check_branch
          %308 = sbr.rel (%p306) target = $region44
        $region43: #{spectral_attention.1} parent=11 // pred_region
          _
        $region44: #{spectral_attention.1} parent=11 // pred_fallthru
          _
      $region12: #{spectral_attention.1} parent=5 // pred_fallthru
        _
      %p309 = scmp.lt.s32.totalorder %s18, 2
      // Predicated region
      $region45: #{spectral_attention.1} parent=5 // pred_check
        %p310 = pneg %p309
      $region46: #{spectral_attention.1} parent=5 // pred_check_branch
        %312 = sbr.rel (%p310) target = $region48
      $region47: #{spectral_attention.1} parent=5 // pred_region
        // Predicated region
        $region49: #{spectral_attention.1} parent=47 // pred_check
          %p313 = pneg %p52
        $region50: #{spectral_attention.1} parent=47 // pred_check_branch
          %315 = sbr.rel (%p313) target = $region52
        $region51: #{spectral_attention.1} parent=47 // pred_region
          %s316 = smul.u32 2, %s26
          %p317 = scmp.lt.s32.totalorder %s25, 1
          %s318 = scalar_select %p317, %s25, 1
          %p319 = scmp.lt.s32.totalorder %s316, 1
          %s320 = scalar_select %p319, %s316, 1
          %s321 = smul.addr %s318, 2
          %s322 = sadd.s32 %s320, %s321
          %s323 = smul.addr %s322, 4
          %s324 = scalar_lea.vmem %s0, %s323
          %s325 = smul.u32 2, %s26
        $region52: #{spectral_attention.1} parent=47 // pred_fallthru
          _
      $region48: #{spectral_attention.1} parent=5 // pred_fallthru
        _
      %p326 = scmp.le.s32.totalorder 1, %s18
      %p327 = scmp.lt.s32.totalorder %s18, 3
      %p328 = pnand %p326, %p327
      %p329 = pneg %p328
      // Predicated region
      $region53: #{spectral_attention.1} parent=5 // pred_check
        _
      $region54: #{spectral_attention.1} parent=5 // pred_check_branch
        %331 = sbr.rel (%p328) target = $region56
      $region55: #{spectral_attention.1} parent=5 // pred_region
        %s332 = ssub.s32 %s18, 1
        %s333 = smul.u32 2, %s28
        %p334 = scmp.lt.s32.totalorder %s27, 1
        %s335 = scalar_select %p334, %s27, 1
        %p336 = scmp.lt.s32.totalorder %s333, 1
        %s337 = scalar_select %p336, %s333, 1
        %s338 = smul.addr %s335, 2
        %s339 = sadd.s32 %s337, %s338
        %s340 = smul.addr %s339, 4
        %s341 = scalar_lea.vmem %s0, %s340
        %p342 = pneg %p58
        %p343 = pneg %p55
        %p344 = pneg %p79
        %p345 = pneg %p76
        %p346 = pneg %p100
        %p347 = pneg %p97
        %p348 = pneg %p121
        %p349 = pneg %p118
        %p350 = pneg %p142
        %p351 = pneg %p139
        %p352 = pneg %p163
        %p353 = pneg %p160
        %s354 = smul.u32 2, %s28
        %p355 = scmp.lt.s32.totalorder %s354, 1
        %s356 = scalar_select %p355, %s354, 1
        %p357 = scmp.lt.s32.totalorder %s28, 0
        %s358 = scalar_select %p357, %s28, 0
        %s359 = sadd.s32 %s358, %s356
        %s360 = smul.addr %s359, 4
        %s361 = scalar_lea.vmem %s6, %s360
        %p362 = pneg %p191
        %p363 = pneg %p188
        %p364 = pneg %p212
        %p365 = pneg %p209
        %p366 = pneg %p233
        %p367 = pneg %p230
        %p368 = pneg %p261
        %p369 = pneg %p258
        %s370 = sand.u32 %s248, 1
        %s371 = scalar_lea.sflag [#allocation4], %s370
        %s372 = sand.u32 %s248, 1
        %s373 = smul.addr %s372, 8
        %s374 = scalar_lea.vmem [#allocation3], %s373
        %s375 = smul.u32 2, %s28
        %p376 = scmp.lt.s32.totalorder %s27, 1
        %s377 = scalar_select %p376, %s27, 1
        %p378 = scmp.lt.s32.totalorder %s375, 1
        %s379 = scalar_select %p378, %s375, 1
        %s380 = smul.addr %s377, 2
        %s381 = sadd.s32 %s379, %s380
        %s382 = smul.addr %s381, 4
        %s383 = scalar_lea.vmem %s0, %s382
        %s384 = smul.u32 2, %s28
        %s385 = smul.u32 2, %s28
        %p386 = scmp.lt.s32.totalorder %s385, 1
        %s387 = scalar_select %p386, %s385, 1
        %p388 = scmp.lt.s32.totalorder %s28, 0
        %s389 = scalar_select %p388, %s28, 0
        %s390 = sadd.s32 %s389, %s387
        %s391 = smul.addr %s390, 4
        %s392 = scalar_lea.vmem %s6, %s391
        %s393 = smul.u32 2, %s28
        %s394 = smul.u32 2, %s28
        %p396 = scmp.eq.s32.totalorder %s28, 0
        // Predicated region
        $region57: #{spectral_attention.1} parent=55 // pred_check
          %p397 = pneg %p396
        $region58: #{spectral_attention.1} parent=55 // pred_check_branch
          %399 = sbr.rel (%p397) target = $region60
        $region59: #{spectral_attention.1} parent=55 // pred_region
          %400 = vst [vmem:[#allocation2] sm:$0x1] 0.0
        $region60: #{spectral_attention.1} parent=55 // pred_fallthru
          _
        %v401 = vld [vmem:[%s383] sm:$0xf]
        %v402 = vld [vmem:[%s383 + $0x4] sm:$0xf]
        %v403 = vld [vmem:[%s1] sm:$0xf]
        %v404 = vld [vmem:[%s1 + $0x4] sm:$0xf]
        %v405 = vld [vmem:[%s1 + $0x8] sm:$0xf]
        %v406 = vld [vmem:[%s1 + $0xc] sm:$0xf]
        %v407 = vld [vmem:[%s2] sm:$0x1]
        %v408 = vunpack.c.l.bf16 %v407
        %v409 = vlaneseq
        %v410 = vshrl.u32 %v409, 7
        %v411 = vsub.s32 0, %v410
        %v412 = vrot.slane %v408, %v411
        %v415 = vunpack.c.l.b16 %v401
        %v416 = vunpack.c.l.b16 %v402
        %v417 = vpack.c.b16 %v416, %v415
        %v422 = vunpack.c.l.b16 %v403
        %v423 = vunpack.c.l.b16 %v404
        %v424 = vunpack.c.l.b16 %v405
        %v425 = vunpack.c.l.b16 %v406
        %v426 = vpack.c.b16 %v423, %v422
        %v427 = vpack.c.b16 %v425, %v424
        %vm430 = vcmask 261120
        %v432 = vsel %vm430, %v417, 0
        %434 = vmatprep.subr.bf16.mxu0 0
        %435 = vmatpush1.bf16.msra.mxu0 %v426
        %436 = vmatprep.subr.bf16.mxu0 0
        %437 = vmatpush1.bf16.msra.mxu0 %v427
        %438 = vmatprep.subr.bf16.mxu0 0
        %439 = vmatpush1.bf16.msra.mxu0 0
        %440 = vmatprep.subr.bf16.mxu0 0
        %441 = vmatpush1.bf16.msra.mxu0 0
        %442 = vmatprep.subr.bf16.mxu0 0
        %443 = vmatpush1.bf16.msra.mxu0 0
        %444 = vmatprep.subr.bf16.mxu0 0
        %445 = vmatpush1.bf16.msra.mxu0 0
        %446 = vmatprep.subr.bf16.mxu0 0
        %447 = vmatpush1.bf16.msra.mxu0 0
        %448 = vmatprep.subr.bf16.mxu0 0
        %449 = vmatpush1.bf16.msra.mxu0 0
        %450 = vmatprep.subr.bf16.mxu0 0
        %451 = vmatpush1.bf16.msra.mxu0 0
        %452 = vmatprep.subr.bf16.mxu0 0
        %453 = vmatpush1.bf16.msra.mxu0 0
        %454 = vmatprep.subr.bf16.mxu0 0
        %455 = vmatpush1.bf16.msra.mxu0 0
        %456 = vmatprep.subr.bf16.mxu0 0
        %457 = vmatpush1.bf16.msra.mxu0 0
        %458 = vmatprep.subr.bf16.mxu0 0
        %459 = vmatpush1.bf16.msra.mxu0 0
        %460 = vmatprep.subr.bf16.mxu0 0
        %461 = vmatpush1.bf16.msra.mxu0 0
        %462 = vmatprep.subr.bf16.mxu0 0
        %463 = vmatpush1.bf16.msra.mxu0 0
        %464 = vmatprep.subr.bf16.mxu0 0
        %465 = vmatpush1.bf16.msra.mxu0 0
        %466 = vmatprep.mubr.bf16.mxu0 0
        %467 = vmatmul.mubr.bf16.gmra.mrb[0].mxu0 %v432
        %v468 = vpop.f32.mrb[0].mxu0
        %v469 = vadd.f32 %v412, %v468
        %v470 = vpop.f32.mrb[0].mxu0
        %v471 = vpop.f32.mrb[0].mxu0
        %v472 = vadd.f32 %v412, %v471
        %v473 = vpop.f32.mrb[0].mxu0
        %474 = vdwg.mxu0
        %v475 = vpack.c.bf16 %v472, %v469
        %v476 = vld [vmem:[%s3] sm:$0xf]
        %v477 = vld [vmem:[%s3 + $0x4] sm:$0xf]
        %v480 = vunpack.c.l.b16 %v476
        %v481 = vunpack.c.l.b16 %v477
        %v482 = vpack.c.b16 %v481, %v480
        %vm484 = vcmask 130048
        %v486 = vsel %vm484, %v475, 0
        %488 = vmatprep.subr.bf16.mxu0 0
        %489 = vmatpush1.bf16.msra.mxu0 %v482
        %490 = vmatprep.subr.bf16.mxu0 0
        %491 = vmatpush1.bf16.msra.mxu0 0
        %492 = vmatprep.subr.bf16.mxu0 0
        %493 = vmatpush1.bf16.msra.mxu0 0
        %494 = vmatprep.subr.bf16.mxu0 0
        %495 = vmatpush1.bf16.msra.mxu0 0
        %496 = vmatprep.subr.bf16.mxu0 0
        %497 = vmatpush1.bf16.msra.mxu0 0
        %498 = vmatprep.subr.bf16.mxu0 0
        %499 = vmatpush1.bf16.msra.mxu0 0
        %500 = vmatprep.subr.bf16.mxu0 0
        %501 = vmatpush1.bf16.msra.mxu0 0
        %502 = vmatprep.subr.bf16.mxu0 0
        %503 = vmatpush1.bf16.msra.mxu0 0
        %504 = vmatprep.subr.bf16.mxu0 0
        %505 = vmatpush1.bf16.msra.mxu0 0
        %506 = vmatprep.subr.bf16.mxu0 0
        %507 = vmatpush1.bf16.msra.mxu0 0
        %508 = vmatprep.subr.bf16.mxu0 0
        %509 = vmatpush1.bf16.msra.mxu0 0
        %510 = vmatprep.subr.bf16.mxu0 0
        %511 = vmatpush1.bf16.msra.mxu0 0
        %512 = vmatprep.subr.bf16.mxu0 0
        %513 = vmatpush1.bf16.msra.mxu0 0
        %514 = vmatprep.subr.bf16.mxu0 0
        %515 = vmatpush1.bf16.msra.mxu0 0
        %516 = vmatprep.subr.bf16.mxu0 0
        %517 = vmatpush1.bf16.msra.mxu0 0
        %518 = vmatprep.subr.bf16.mxu0 0
        %519 = vmatpush1.bf16.msra.mxu0 0
        %520 = vmatprep.mubr.bf16.mxu0 0
        %521 = vmatmul.mubr.bf16.gmra.mrb[0].mxu0 %v486
        %v522 = vpop.f32.mrb[0].mxu0
        %v523 = vadd.f32 0.0, %v522
        %v524 = vpop.f32.mrb[0].mxu0
        %v525 = vpop.f32.mrb[0].mxu0
        %v526 = vadd.f32 0.0, %v525
        %v527 = vpop.f32.mrb[0].mxu0
        %528 = vdwg.mxu0
        %v529 = vpack.c.bf16 %v526, %v523
        %v530 = vld [vmem:[%s4] sm:$0xff]
        %v531 = vld [vmem:[%s4 + $0x8] sm:$0xf]
        %v532 = vld [vmem:[%s5] sm:$0x7]
        %v533 = vunpack.c.l.bf16 %v532
        %v535 = vlaneseq
        %v536 = vshrl.u32 %v535, 7
        %v537 = vsub.s32 0, %v536
        %v538 = vrot.slane %v533, %v537
        %v539 = vlaneseq
        %v540 = vshrl.u32 %v539, 7
        %v541 = vsub.s32 2, %v540
        %v542 = vrot.slane %v533, %v541
        %v543 = vlaneseq
        %v544 = vshrl.u32 %v543, 7
        %v545 = vsub.s32 4, %v544
        %v546 = vrot.slane %v533, %v545
        %v550 = vlaneseq
        %v551 = vshrl.u32 %v550, 7
        %v552 = vsub.s32 0, %v551
        %v553 = vrot.slane %v538, %v552
        %v554 = vlaneseq
        %v555 = vshrl.u32 %v554, 7
        %v556 = vsub.s32 0, %v555
        %v557 = vrot.slane %v542, %v556
        %v558 = vlaneseq
        %v559 = vshrl.u32 %v558, 7
        %v560 = vsub.s32 0, %v559
        %v561 = vrot.slane %v546, %v560
        %v564 = vunpack.c.l.b16 %v530
        %v565 = vunpack.c.h.b16 %v530
        %v566 = vunpack.c.l.b16 %v531
        %v567 = vpack.c.b16 %v564, %v564
        %v568 = vpack.c.b16 %v565, %v565
        %v569 = vpack.c.b16 %v566, %v566
        %vm570 = vcmask 64512
        %v572 = vsel %vm570, %v529, 0
        %vm574 = vcmask 1043456
        %v576 = vsel %vm574, %v567, 0
        %v579 = vsel %vm574, %v568, 0
        %v582 = vsel %vm574, %v569, 0
        %584 = vmatprep.subr.bf16.mxu0 %v579
        %585 = vmatpush1.bf16.msra.mxu0 %v576
        %586 = vmatprep.subr.bf16.mxu0 0
        %587 = vmatpush1.bf16.msra.mxu0 0
        %588 = vmatprep.subr.bf16.mxu0 0
        %589 = vmatpush1.bf16.msra.mxu0 0
        %590 = vmatprep.subr.bf16.mxu0 0
        %591 = vmatpush1.bf16.msra.mxu0 0
        %592 = vmatprep.subr.bf16.mxu0 0
        %593 = vmatpush1.bf16.msra.mxu0 0
        %594 = vmatprep.subr.bf16.mxu0 0
        %595 = vmatpush1.bf16.msra.mxu0 0
        %596 = vmatprep.subr.bf16.mxu0 0
        %597 = vmatpush1.bf16.msra.mxu0 0
        %598 = vmatprep.subr.bf16.mxu0 0
        %599 = vmatpush1.bf16.msra.mxu0 0
        %600 = vmatprep.subr.bf16.mxu0 0
        %601 = vmatpush1.bf16.msra.mxu0 0
        %602 = vmatprep.subr.bf16.mxu0 0
        %603 = vmatpush1.bf16.msra.mxu0 0
        %604 = vmatprep.subr.bf16.mxu0 0
        %605 = vmatpush1.bf16.msra.mxu0 0
        %606 = vmatprep.subr.bf16.mxu0 0
        %607 = vmatpush1.bf16.msra.mxu0 0
        %608 = vmatprep.subr.bf16.mxu0 0
        %609 = vmatpush1.bf16.msra.mxu0 0
        %610 = vmatprep.subr.bf16.mxu0 0
        %611 = vmatpush1.bf16.msra.mxu0 0
        %612 = vmatprep.subr.bf16.mxu0 0
        %613 = vmatpush1.bf16.msra.mxu0 0
        %614 = vmatprep.subr.bf16.mxu0 0
        %615 = vmatpush1.bf16.msra.mxu0 0
        %616 = vmatprep.mubr.bf16.mxu0 0
        %617 = vmatmul.mubr.bf16.gmra.mrb[0].mxu0 %v572
        %v618 = vpop.f32.mrb[0].mxu0
        %v619 = vadd.f32 %v553, %v618
        %v620 = vpop.f32.mrb[0].mxu0
        %v621 = vadd.f32 %v557, %v620
        %v622 = vpop.f32.mrb[0].mxu0
        %v623 = vadd.f32 %v553, %v622
        %v624 = vpop.f32.mrb[0].mxu0
        %v625 = vadd.f32 %v557, %v624
        %626 = vdwg.mxu0
        %627 = vmatprep.subr.bf16.mxu0 0
        %628 = vmatpush1.bf16.msra.mxu0 %v582
        %629 = vmatprep.subr.bf16.mxu0 0
        %630 = vmatpush1.bf16.msra.mxu0 0
        %631 = vmatprep.subr.bf16.mxu0 0
        %632 = vmatpush1.bf16.msra.mxu0 0
        %633 = vmatprep.subr.bf16.mxu0 0
        %634 = vmatpush1.bf16.msra.mxu0 0
        %635 = vmatprep.subr.bf16.mxu0 0
        %636 = vmatpush1.bf16.msra.mxu0 0
        %637 = vmatprep.subr.bf16.mxu0 0
        %638 = vmatpush1.bf16.msra.mxu0 0
        %639 = vmatprep.subr.bf16.mxu0 0
        %640 = vmatpush1.bf16.msra.mxu0 0
        %641 = vmatprep.subr.bf16.mxu0 0
        %642 = vmatpush1.bf16.msra.mxu0 0
        %643 = vmatprep.subr.bf16.mxu0 0
        %644 = vmatpush1.bf16.msra.mxu0 0
        %645 = vmatprep.subr.bf16.mxu0 0
        %646 = vmatpush1.bf16.msra.mxu0 0
        %647 = vmatprep.subr.bf16.mxu0 0
        %648 = vmatpush1.bf16.msra.mxu0 0
        %649 = vmatprep.subr.bf16.mxu0 0
        %650 = vmatpush1.bf16.msra.mxu0 0
        %651 = vmatprep.subr.bf16.mxu0 0
        %652 = vmatpush1.bf16.msra.mxu0 0
        %653 = vmatprep.subr.bf16.mxu0 0
        %654 = vmatpush1.bf16.msra.mxu0 0
        %655 = vmatprep.subr.bf16.mxu0 0
        %656 = vmatpush1.bf16.msra.mxu0 0
        %657 = vmatprep.subr.bf16.mxu0 0
        %658 = vmatpush1.bf16.msra.mxu0 0
        %659 = vmatprep.mubr.bf16.mxu0 0
        %660 = vmatmul.mubr.bf16.gmra.mrb[0].mxu0 %v572
        %v661 = vpop.f32.mrb[0].mxu0
        %v662 = vadd.f32 %v561, %v661
        %v663 = vpop.f32.mrb[0].mxu0
        %v664 = vpop.f32.mrb[0].mxu0
        %v665 = vadd.f32 %v561, %v664
        %v666 = vpop.f32.mrb[0].mxu0
        %667 = vdwg.mxu0
        %v668 = vmul.f32 %v621, %v662
        %v669 = vmul.f32 %v625, %v665
        %v670 = vpack.c.bf16 %v669, %v668
        %v671 = vld [vmem:[%s392] sm:$0xf]
        %v672 = vld [vmem:[%s392 + $0x4] sm:$0xf]
        %v673 = vld [vmem:[#allocation2] sm:$0x1]
        %v675 = vlaneseq
        %v676 = vshrl.u32 %v675, 7
        %v677 = vsub.s32 0, %v676
        %v678 = vrot.slane %v673, %v677
        %v682 = vunpack.c.l.b16 %v671
        %v683 = vunpack.c.l.b16 %v672
        %v684 = vpack.c.b16 %v683, %v682
        %v686 = vsel %vm484, %v684, 0
        %688 = vmatprep.subr.bf16.mxu0 0
        %689 = vmatpush1.bf16.msra.mxu0 %v670
        %690 = vmatprep.subr.bf16.mxu0 0
        %691 = vmatpush1.bf16.msra.mxu0 0
        %692 = vmatprep.subr.bf16.mxu0 0
        %693 = vmatpush1.bf16.msra.mxu0 0
        %694 = vmatprep.subr.bf16.mxu0 0
        %695 = vmatpush1.bf16.msra.mxu0 0
        %696 = vmatprep.subr.bf16.mxu0 0
        %697 = vmatpush1.bf16.msra.mxu0 0
        %698 = vmatprep.subr.bf16.mxu0 0
        %699 = vmatpush1.bf16.msra.mxu0 0
        %700 = vmatprep.subr.bf16.mxu0 0
        %701 = vmatpush1.bf16.msra.mxu0 0
        %702 = vmatprep.subr.bf16.mxu0 0
        %703 = vmatpush1.bf16.msra.mxu0 0
        %704 = vmatprep.subr.bf16.mxu0 0
        %705 = vmatpush1.bf16.msra.mxu0 0
        %706 = vmatprep.subr.bf16.mxu0 0
        %707 = vmatpush1.bf16.msra.mxu0 0
        %708 = vmatprep.subr.bf16.mxu0 0
        %709 = vmatpush1.bf16.msra.mxu0 0
        %710 = vmatprep.subr.bf16.mxu0 0
        %711 = vmatpush1.bf16.msra.mxu0 0
        %712 = vmatprep.subr.bf16.mxu0 0
        %713 = vmatpush1.bf16.msra.mxu0 0
        %714 = vmatprep.subr.bf16.mxu0 0
        %715 = vmatpush1.bf16.msra.mxu0 0
        %716 = vmatprep.subr.bf16.mxu0 0
        %717 = vmatpush1.bf16.msra.mxu0 0
        %718 = vmatprep.subr.bf16.mxu0 0
        %719 = vmatpush1.bf16.msra.mxu0 0
        %720 = vmatprep.mubr.bf16.mxu0 0
        %721 = vmatmul.mubr.bf16.gmra.mrb[0].mxu0 %v686
        %v722 = vpop.f32.mrb[0].mxu0
        %v723 = vadd.f32 %v678, %v722
        %v724 = vpop.f32.mrb[0].mxu0
        %v725 = vpop.f32.mrb[0].mxu0
        %v726 = vadd.f32 %v678, %v725
        %v727 = vpop.f32.mrb[0].mxu0
        %728 = vdwg.mxu0
        %729 = vst [vmem:[#allocation2 - $0x7] sm:$0x80] %v726
        %v730 = vmul.f32 %v619, %v723
        %v731 = vmul.f32 %v623, %v726
        %v732 = vpack.c.bf16 %v731, %v730
        %v733 = vld [vmem:[%s7] sm:$0xf]
        %v734 = vld [vmem:[%s7 + $0x4] sm:$0xf]
        %v735 = vld [vmem:[%s7 + $0x8] sm:$0xf]
        %v736 = vld [vmem:[%s7 + $0xc] sm:$0xf]
        %v737 = vld [vmem:[%s7 + $0x10] sm:$0xf]
        %v738 = vld [vmem:[%s7 + $0x14] sm:$0xf]
        %v739 = vld [vmem:[%s7 + $0x18] sm:$0xf]
        %v740 = vld [vmem:[%s7 + $0x1c] sm:$0xf]
        %v741 = vld [vmem:[%s7 + $0x20] sm:$0xf]
        %v742 = vld [vmem:[%s7 + $0x24] sm:$0xf]
        %v743 = vld [vmem:[%s7 + $0x28] sm:$0xf]
        %v744 = vld [vmem:[%s7 + $0x2c] sm:$0xf]
        %v745 = vld [vmem:[%s7 + $0x30] sm:$0xf]
        %v746 = vld [vmem:[%s7 + $0x34] sm:$0xf]
        %v747 = vld [vmem:[%s7 + $0x38] sm:$0xf]
        %v748 = vld [vmem:[%s7 + $0x3c] sm:$0xf]
        %v749 = vld [vmem:[%s8] sm:$0x1]
        %v750 = vunpack.c.l.bf16 %v749
        %v751 = vlaneseq
        %v752 = vshrl.u32 %v751, 7
        %v753 = vsub.s32 0, %v752
        %v754 = vrot.slane %v750, %v753
        %v771 = vunpack.c.l.b16 %v733
        %v772 = vunpack.c.l.b16 %v734
        %v773 = vunpack.c.l.b16 %v735
        %v774 = vunpack.c.l.b16 %v736
        %v775 = vunpack.c.l.b16 %v737
        %v776 = vunpack.c.l.b16 %v738
        %v777 = vunpack.c.l.b16 %v739
        %v778 = vunpack.c.l.b16 %v740
        %v779 = vunpack.c.l.b16 %v741
        %v780 = vunpack.c.l.b16 %v742
        %v781 = vunpack.c.l.b16 %v743
        %v782 = vunpack.c.l.b16 %v744
        %v783 = vunpack.c.l.b16 %v745
        %v784 = vunpack.c.l.b16 %v746
        %v785 = vunpack.c.l.b16 %v747
        %v786 = vunpack.c.l.b16 %v748
        %v787 = vpack.c.b16 %v772, %v771
        %v788 = vpack.c.b16 %v774, %v773
        %v789 = vpack.c.b16 %v776, %v775
        %v790 = vpack.c.b16 %v778, %v777
        %v791 = vpack.c.b16 %v780, %v779
        %v792 = vpack.c.b16 %v782, %v781
        %v793 = vpack.c.b16 %v784, %v783
        %v794 = vpack.c.b16 %v786, %v785
        %803 = vmatprep.subr.bf16.mxu0 0
        %804 = vmatpush1.bf16.msra.mxu0 %v787
        %805 = vmatprep.subr.bf16.mxu0 0
        %806 = vmatpush1.bf16.msra.mxu0 %v788
        %807 = vmatprep.subr.bf16.mxu0 0
        %808 = vmatpush1.bf16.msra.mxu0 %v789
        %809 = vmatprep.subr.bf16.mxu0 0
        %810 = vmatpush1.bf16.msra.mxu0 %v790
        %811 = vmatprep.subr.bf16.mxu0 0
        %812 = vmatpush1.bf16.msra.mxu0 %v791
        %813 = vmatprep.subr.bf16.mxu0 0
        %814 = vmatpush1.bf16.msra.mxu0 %v792
        %815 = vmatprep.subr.bf16.mxu0 0
        %816 = vmatpush1.bf16.msra.mxu0 %v793
        %817 = vmatprep.subr.bf16.mxu0 0
        %818 = vmatpush1.bf16.msra.mxu0 %v794
        %819 = vmatprep.subr.bf16.mxu0 0
        %820 = vmatpush1.bf16.msra.mxu0 0
        %821 = vmatprep.subr.bf16.mxu0 0
        %822 = vmatpush1.bf16.msra.mxu0 0
        %823 = vmatprep.subr.bf16.mxu0 0
        %824 = vmatpush1.bf16.msra.mxu0 0
        %825 = vmatprep.subr.bf16.mxu0 0
        %826 = vmatpush1.bf16.msra.mxu0 0
        %827 = vmatprep.subr.bf16.mxu0 0
        %828 = vmatpush1.bf16.msra.mxu0 0
        %829 = vmatprep.subr.bf16.mxu0 0
        %830 = vmatpush1.bf16.msra.mxu0 0
        %831 = vmatprep.subr.bf16.mxu0 0
        %832 = vmatpush1.bf16.msra.mxu0 0
        %833 = vmatprep.subr.bf16.mxu0 0
        %834 = vmatpush1.bf16.msra.mxu0 0
        %835 = vmatprep.mubr.bf16.mxu0 0
        %836 = vmatmul.mubr.bf16.gmra.mrb[0].mxu0 %v732
        %v837 = vpop.f32.mrb[0].mxu0
        %v838 = vadd.f32 %v754, %v837
        %v839 = vpop.f32.mrb[0].mxu0
        %v840 = vpop.f32.mrb[0].mxu0
        %v841 = vadd.f32 %v754, %v840
        %v842 = vpop.f32.mrb[0].mxu0
        %843 = vdwg.mxu0
        %v844 = vpack.c.bf16 %v841, %v838
        %v846 = vunpack.c.l.b16 %v844
        %v847 = vunpack.c.h.b16 %v844
        %v848 = vpack.c.b16 %v846, %v846
        %v849 = vpack.c.b16 %v847, %v847
        %vm852 = vcmask 257024
        %853 = vst.msk [vmem:[%s374] sm:$0xf] %vm852, %v848
        %854 = vst.msk [vmem:[%s374 + $0x4] sm:$0xf] %vm852, %v849
        %s855 = sand.u32 %s248, 1
        %s856 = scalar_lea.sflag [#allocation4], %s855
        %s857 = sand.u32 %s248, 1
        %s858 = smul.addr %s857, 8
        %s859 = scalar_lea.vmem [#allocation3], %s858
        // Predicated region
        $region61: #{spectral_attention.1} parent=55 // pred_check
          %p860 = pneg %p258
        $region62: #{spectral_attention.1} parent=55 // pred_check_branch
          %862 = sbr.rel (%p860) target = $region64
        $region63: #{spectral_attention.1} parent=55 // pred_region
          %s863 = smul.u32 2, %s28
          %s865 = ssub.s32 128, 128
          %866 = vsyncadd %s856, %s865
          %s867 = smul.addr %s27, 2
          %s868 = sadd.s32 %s863, %s867
          %s869 = smul.addr %s868, 64
          %s870 = scalar_lea.hbm %s9, %s869
          %s871 = sshll.u32 %s859, 4
          %s872 = int_to_ptr.vmem [resolvable:$true] %s871
          %877 = dma.vmem_to_hbm [thread:$0]  %s872, 128, %s870, %s856, 64, 64, 4
        $region64: #{spectral_attention.1} parent=55 // pred_fallthru
          _
      $region56: #{spectral_attention.1} parent=5 // pred_fallthru
        _
      %p878 = scmp.le.s32.totalorder 2, %s18
      // Predicated region
      $region65: #{spectral_attention.1} parent=5 // pred_check
        %p879 = pneg %p878
      $region66: #{spectral_attention.1} parent=5 // pred_check_branch
        %881 = sbr.rel (%p879) target = $region68
      $region67: #{spectral_attention.1} parent=5 // pred_region
        %s882 = ssub.s32 %s18, 2
        // Predicated region
        $region69: #{spectral_attention.1} parent=67 // pred_check
          %p883 = pneg %p264
        $region70: #{spectral_attention.1} parent=67 // pred_check_branch
          %885 = sbr.rel (%p883) target = $region72
        $region71: #{spectral_attention.1} parent=67 // pred_region
          %s886 = sand.u32 %s249, 1
          %s887 = scalar_lea.sflag [#allocation4], %s886
          %s888 = sand.u32 %s249, 1
          %s889 = smul.addr %s888, 8
          %s890 = scalar_lea.vmem [#allocation3], %s889
          %891 = dma.done %s887, 128
        $region72: #{spectral_attention.1} parent=67 // pred_fallthru
          _
      $region68: #{spectral_attention.1} parent=5 // pred_fallthru
        _
    $region6: #{spectral_attention.1} parent=1 // loop_footer
      %s22 = sadd.s32 1, %s18
    $region7: #{spectral_attention.1} parent=1 // loop_footer_branch
      %17 = sbr.rel target = $region3
    $region8: #{spectral_attention.1} parent=1 // loop_exit
      _
    %892 = vsyncpa [#allocation4], 1
    %s893 = scalar_lea.sflag [#allocation4], 1
    %894 = vsyncpa %s893, 1

</llo_original>
